<compile_context>
chip_gen: v7x
topology: tpu7x:2x2x1
jax: 0.10.0
libtpu: 0.0.40
codegen_flags: <defaults>
</compile_context>

<pallas_src>
import jax
import jax.numpy as jnp
from jax.experimental import pallas as pl
from jax.experimental.pallas import tpu as pltpu


def _round_up(x, m):
    return int(pl.cdiv(x, m)) * m


def mlp_kernel(x_ref, w1_ref, b1_ref, w2_ref, b2_ref, o_ref):
    # Cast x to bf16 in-kernel (input stream stays f32/unpadded in HBM);
    # both matmuls run on the MXU with f32 accumulation, bias/ReLU on the VPU.
    x = x_ref[...].astype(jnp.bfloat16)
    h = jnp.dot(x, w1_ref[...], preferred_element_type=jnp.float32)
    h = jnp.maximum(h + b1_ref[...], 0.0)
    out = jnp.dot(h.astype(jnp.bfloat16), w2_ref[...],
                  preferred_element_type=jnp.float32)
    o_ref[...] = (out + b2_ref[...]).astype(o_ref.dtype)


def prepare_params(w1, b1, w2, b2):
    """One-time parameter prep (hoisted out of the per-call hot path):
    bf16 weights for the MXU, f32 row-vector biases for the VPU."""
    return (w1.astype(jnp.bfloat16),
            b1.astype(jnp.float32).reshape(1, -1),
            w2.astype(jnp.bfloat16),
            b2.astype(jnp.float32).reshape(1, -1))


def node_classification_forward(x, w1_bf, b1_f, w2_bf, b2_f, *, tile_n=2048):
    n, dim_in = x.shape
    dim_hid = w1_bf.shape[1]
    num_class = w2_bf.shape[1]

    # Tile the node dimension. Cap tn so the grid has >= 2 steps (lets v7x
    # shard the "parallel" axis over its 2 TensorCores); keep tn a multiple
    # of 8 (sublane granularity).
    tn_cap = _round_up(pl.cdiv(n, 2), 8)
    tn = max(8, min(_round_up(tile_n, 8), tn_cap))
    n_p = _round_up(n, tn)

    # Only the node dimension is (possibly) padded; feature dims stay unpadded
    # (a block last-dim equal to the full array dim is legal even when < 128).
    if n_p != n:
        x_in = jnp.zeros((n_p, dim_in), x.dtype).at[:n, :].set(x)
    else:
        x_in = x

    out = pl.pallas_call(
        mlp_kernel,
        out_shape=jax.ShapeDtypeStruct((n_p, num_class), jnp.float32),
        grid=(n_p // tn,),
        in_specs=[
            pl.BlockSpec((tn, dim_in), lambda i: (i, 0)),       # x: tiled nodes
            pl.BlockSpec((dim_in, dim_hid), lambda i: (0, 0)),  # W1: resident
            pl.BlockSpec((1, dim_hid), lambda i: (0, 0)),       # b1
            pl.BlockSpec((dim_hid, num_class), lambda i: (0, 0)),  # W2: resident
            pl.BlockSpec((1, num_class), lambda i: (0, 0)),     # b2
        ],
        out_specs=pl.BlockSpec((tn, num_class), lambda i: (i, 0)),
        compiler_params=pltpu.CompilerParams(
            dimension_semantics=("parallel",),
            vmem_limit_bytes=32 * 1024 * 1024,
        ),
    )(x_in, w1_bf, b1_f, w2_bf, b2_f)

    return out[:n, :].astype(x.dtype)


def init_params(key, dim_in, dim_hid, num_class, dtype=jnp.float32):
    # torch.nn.Linear default init: U(-1/sqrt(fan_in), 1/sqrt(fan_in)).
    k1, k2, k3, k4 = jax.random.split(key, 4)
    bound1 = 1.0 / jnp.sqrt(dim_in)
    bound2 = 1.0 / jnp.sqrt(dim_hid)
    w1 = jax.random.uniform(k1, (dim_in, dim_hid), dtype, -bound1, bound1)
    b1 = jax.random.uniform(k2, (dim_hid,), dtype, -bound1, bound1)
    w2 = jax.random.uniform(k3, (dim_hid, num_class), dtype, -bound2, bound2)
    b2 = jax.random.uniform(k4, (num_class,), dtype, -bound2, bound2)
    return w1, b1, w2, b2


if __name__ == "__main__":
    key = jax.random.PRNGKey(0)
    kx, kp = jax.random.split(key)

    # Small demo shapes; with n=1024 the v7x-friendly cap gives a 2-step grid.
    num_nodes, dim_in, dim_hid, num_class = 1024, 32, 64, 8
    x = jax.random.normal(kx, (num_nodes, dim_in), dtype=jnp.float32)
    w1, b1, w2, b2 = init_params(kp, dim_in, dim_hid, num_class)

    # One-time weight prep (bf16 cast / bias reshape) outside the hot path.
    w1_bf, b1_f, w2_bf, b2_f = prepare_params(w1, b1, w2, b2)

    out = node_classification_forward(x, w1_bf, b1_f, w2_bf, b2_f, tile_n=2048)
    out = jax.block_until_ready(out)

    # Plain-JAX f32 reference (same math as the PyTorch forward). Tolerance is
    # loosened because the kernel uses bf16 MXU operands with f32 accumulation.
    ref = jnp.maximum(x @ w1 + b1, 0.0) @ w2 + b2
    assert out.shape == (num_nodes, num_class)
    assert jnp.allclose(out, ref, atol=5e-2, rtol=5e-2)

    print("KERNEL_OK")
</pallas_src>

<mosaic_0001>
module attributes {stable_mosaic.version = 11 : i64} {
  func.func @mlp_kernel(%arg0: i32, %arg1: memref<512x32xf32, #tpu.memory_space<vmem>>, %arg2: memref<32x64xbf16, #tpu.memory_space<vmem>>, %arg3: memref<1x64xf32, #tpu.memory_space<vmem>>, %arg4: memref<64x8xbf16, #tpu.memory_space<vmem>>, %arg5: memref<1x8xf32, #tpu.memory_space<vmem>>, %arg6: memref<512x8xf32, #tpu.memory_space<vmem>>) attributes {dimension_semantics = [#tpu.dimension_semantics<parallel>], iteration_bounds = array<i64: 2>, scalar_prefetch = 0 : i64, scratch_operands = 0 : i64, tpu.core_type = #tpu.core_type<tc>, window_params = [{transform_indices = @transform_0, window_bounds = array<i64: 512, 32>}, {pipeline_mode = #tpu.pipeline_mode<synchronous>, transform_indices = @transform_1, window_bounds = array<i64: 32, 64>}, {pipeline_mode = #tpu.pipeline_mode<synchronous>, transform_indices = @transform_2, window_bounds = array<i64: 1, 64>}, {pipeline_mode = #tpu.pipeline_mode<synchronous>, transform_indices = @transform_3, window_bounds = array<i64: 64, 8>}, {pipeline_mode = #tpu.pipeline_mode<synchronous>, transform_indices = @transform_4, window_bounds = array<i64: 1, 8>}, {transform_indices = @transform_5, window_bounds = array<i64: 512, 8>}]} {
    %c0 = arith.constant 0 : index
    %c0_0 = arith.constant 0 : index
    %0 = vector.load %arg1[%c0, %c0_0] : memref<512x32xf32, #tpu.memory_space<vmem>>, vector<512x32xf32>
    %1 = arith.truncf %0 : vector<512x32xf32> to vector<512x32xbf16>
    %c0_1 = arith.constant 0 : index
    %c0_2 = arith.constant 0 : index
    %2 = vector.load %arg2[%c0_1, %c0_2] : memref<32x64xbf16, #tpu.memory_space<vmem>>, vector<32x64xbf16>
    %cst = arith.constant dense<0.000000e+00> : vector<512x64xf32>
    %3 = tpu.matmul %1, %2, %cst {dimension_numbers = #tpu.dot_dimension_numbers<[1], [0], [0], [1], [0, 0, 1, 1], [], []>} : vector<512x32xbf16>, vector<32x64xbf16>, vector<512x64xf32> -> vector<512x64xf32>
    %c0_3 = arith.constant 0 : index
    %c0_4 = arith.constant 0 : index
    %4 = vector.load %arg3[%c0_3, %c0_4] : memref<1x64xf32, #tpu.memory_space<vmem>>, vector<1x64xf32>
    %5 = vector.broadcast %4 : vector<1x64xf32> to vector<512x64xf32>
    %6 = arith.addf %3, %5 : vector<512x64xf32>
    %cst_5 = arith.constant 0.000000e+00 : f32
    %7 = vector.broadcast %cst_5 : f32 to vector<512x64xf32>
    %8 = arith.maximumf %6, %7 : vector<512x64xf32>
    %9 = arith.truncf %8 : vector<512x64xf32> to vector<512x64xbf16>
    %c0_6 = arith.constant 0 : index
    %c0_7 = arith.constant 0 : index
    %10 = vector.load %arg4[%c0_6, %c0_7] : memref<64x8xbf16, #tpu.memory_space<vmem>>, vector<64x8xbf16>
    %cst_8 = arith.constant dense<0.000000e+00> : vector<512x8xf32>
    %11 = tpu.matmul %9, %10, %cst_8 {dimension_numbers = #tpu.dot_dimension_numbers<[1], [0], [0], [1], [0, 0, 1, 1], [], []>} : vector<512x64xbf16>, vector<64x8xbf16>, vector<512x8xf32> -> vector<512x8xf32>
    %c0_9 = arith.constant 0 : index
    %c0_10 = arith.constant 0 : index
    %12 = vector.load %arg5[%c0_9, %c0_10] : memref<1x8xf32, #tpu.memory_space<vmem>>, vector<1x8xf32>
    %13 = vector.broadcast %12 : vector<1x8xf32> to vector<512x8xf32>
    %14 = arith.addf %11, %13 : vector<512x8xf32>
    %c0_11 = arith.constant 0 : index
    %c0_12 = arith.constant 0 : index
    %15 = vector.load %arg6[%c0_11, %c0_12] : memref<512x8xf32, #tpu.memory_space<vmem>>, vector<512x8xf32>
    tpu.vector_store %arg6[%c0_11, %c0_12], %14 {strides = array<i32>} : memref<512x8xf32, #tpu.memory_space<vmem>>, vector<512x8xf32>,
    return
  }
  func.func @transform_0(%arg0: i32) -> (i32, i32) {
    %c0_i32 = arith.constant 0 : i32
    %c0_i32_0 = arith.constant 0 : i32
    return %arg0, %c0_i32 : i32, i32
  }
  func.func @transform_1(%arg0: i32) -> (i32, i32) {
    %c0_i32 = arith.constant 0 : i32
    %c0_i32_0 = arith.constant 0 : i32
    %c0_i32_1 = arith.constant 0 : i32
    return %c0_i32, %c0_i32_0 : i32, i32
  }
  func.func @transform_2(%arg0: i32) -> (i32, i32) {
    %c0_i32 = arith.constant 0 : i32
    %c0_i32_0 = arith.constant 0 : i32
    %c0_i32_1 = arith.constant 0 : i32
    return %c0_i32, %c0_i32_0 : i32, i32
  }
  func.func @transform_3(%arg0: i32) -> (i32, i32) {
    %c0_i32 = arith.constant 0 : i32
    %c0_i32_0 = arith.constant 0 : i32
    %c0_i32_1 = arith.constant 0 : i32
    return %c0_i32, %c0_i32_0 : i32, i32
  }
  func.func @transform_4(%arg0: i32) -> (i32, i32) {
    %c0_i32 = arith.constant 0 : i32
    %c0_i32_0 = arith.constant 0 : i32
    %c0_i32_1 = arith.constant 0 : i32
    return %c0_i32, %c0_i32_0 : i32, i32
  }
  func.func @transform_5(%arg0: i32) -> (i32, i32) {
    %c0_i32 = arith.constant 0 : i32
    %c0_i32_0 = arith.constant 0 : i32
    return %arg0, %c0_i32 : i32, i32
  }
}

</mosaic_0001>

<llo_original>
// kernel: tpu_custom_call.1
$region0: #{tpu_custom_call.1}
  #allocation0 [shape = 'u32[]', space=smem, size = 0x4, offset = 0x4, fixed_abs, tag = 'smem constant byte address 0x4 - core index']
  #allocation1 [shape = 'u32[144,128]{1,0:T(1,128)}', space=vmem, size = 0x12000, scoped, tag = 'internal scratch']
  %s0 = inlined_call_operand.vmem [shape: f32[1024,32], index: 0, kind: input, shape index: {}]
  %s1 = inlined_call_operand.vmem [shape: bf16[32,64], index: 1, kind: input, shape index: {}]
  %s2 = inlined_call_operand.vmem [shape: f32[1,64], index: 2, kind: input, shape index: {}]
  %s3 = inlined_call_operand.vmem [shape: bf16[64,8], index: 3, kind: input, shape index: {}]
  %s4 = inlined_call_operand.vmem [shape: f32[1,8], index: 4, kind: input, shape index: {}]
  %s5 = inlined_call_operand.vmem [shape: f32[1024,8], index: 5, kind: output, shape index: {}]
  %s6 = sld [smem:[#allocation0]]
  $region53: #{tpu_custom_call.1} parent=0
    _
  %s8 = ssub.s32 1, %s6
  %s9 = scalar_select 0, %s8, %s6
  loop: start=0, step=1, limit=4
  $region2: #{tpu_custom_call.1} parent=0 // loop_pre_header
    _
  $region3: #{tpu_custom_call.1} parent=0 // loop_header
    %s11 = sphi 0, %s15
    %p12 = scmp.ge.s32.totalorder %s11, 4
    %s21 = sphi 0, %s23
    %s24 = sphi 0, %s21
    %s25 = sphi 0, %s24
    %s41 = sphi 0, %s25
    %s45 = sphi 0, %s45
    %s47 = sphi 0, %s45
    %s48 = sphi 0, %s47
    %s62 = sphi 0, %s48
    %s66 = sphi 0, %s66
    %s68 = sphi 0, %s66
    %s69 = sphi 0, %s68
    %s83 = sphi 0, %s69
    %s87 = sphi 0, %s87
    %s89 = sphi 0, %s87
    %s90 = sphi 0, %s89
    %s104 = sphi 0, %s90
    %s108 = sphi 0, %s108
    %s110 = sphi 0, %s108
    %s111 = sphi 0, %s110
    %s125 = sphi 0, %s111
    %s131 = sphi 0, %s133
    %s134 = sphi 0, %s131
    %s135 = sphi 0, %s134
    %s151 = sphi 0, %s135
  $region4: #{tpu_custom_call.1} parent=0 // loop_header_branch
    %14 = sbr.rel (%p12) target = $region8
  $region5: #{tpu_custom_call.1} parent=0 // loop_body
    %s16 = ssub.s32 %s11, 1
    %s17 = ssub.s32 %s11, 2
    %s18 = sadd.s32 %s11, 1
    %s19 = ssub.s32 %s11, %s18
    %p20 = scmp.eq.s32.totalorder %s19, 0
    %s22 = sadd.s32 %s21, 1
    %s23 = scalar_select %p20, %s21, %s22
    %p26 = pneg %p20
    %p27 = scmp.eq.s32.totalorder %s11, 1
    %p28 = por %p26, %p27
    %p29 = scmp.ne.s32.totalorder %s21, %s24
    %p30 = scmp.eq.s32.totalorder %s11, 0
    %p31 = por %p29, %p30
    %p32 = scmp.ne.s32.totalorder %s21, %s24
    %p33 = scmp.eq.s32.totalorder %s16, 1
    %p34 = por %p32, %p33
    %p35 = scmp.ne.s32.totalorder %s24, %s25
    %p36 = scmp.eq.s32.totalorder %s16, 0
    %p37 = por %p35, %p36
    %p38 = scmp.ne.s32.totalorder %s24, %s25
    %p39 = scmp.eq.s32.totalorder %s17, 1
    %p40 = por %p38, %p39
    %p42 = scmp.ne.s32.totalorder %s25, %s41
    %p43 = scmp.eq.s32.totalorder %s17, 0
    %p44 = por %p42, %p43
    %s46 = sadd.s32 %s45, 1
    %p49 = scmp.eq.s32.totalorder %s11, 1
    %p50 = scmp.ne.s32.totalorder %s45, %s47
    %p51 = scmp.eq.s32.totalorder %s11, 0
    %p52 = por %p50, %p51
    %p53 = scmp.ne.s32.totalorder %s45, %s47
    %p54 = scmp.eq.s32.totalorder %s16, 1
    %p55 = por %p53, %p54
    %p56 = scmp.ne.s32.totalorder %s47, %s48
    %p57 = scmp.eq.s32.totalorder %s16, 0
    %p58 = por %p56, %p57
    %p59 = scmp.ne.s32.totalorder %s47, %s48
    %p60 = scmp.eq.s32.totalorder %s17, 1
    %p61 = por %p59, %p60
    %p63 = scmp.ne.s32.totalorder %s48, %s62
    %p64 = scmp.eq.s32.totalorder %s17, 0
    %p65 = por %p63, %p64
    %s67 = sadd.s32 %s66, 1
    %p70 = scmp.eq.s32.totalorder %s11, 1
    %p71 = scmp.ne.s32.totalorder %s66, %s68
    %p72 = scmp.eq.s32.totalorder %s11, 0
    %p73 = por %p71, %p72
    %p74 = scmp.ne.s32.totalorder %s66, %s68
    %p75 = scmp.eq.s32.totalorder %s16, 1
    %p76 = por %p74, %p75
    %p77 = scmp.ne.s32.totalorder %s68, %s69
    %p78 = scmp.eq.s32.totalorder %s16, 0
    %p79 = por %p77, %p78
    %p80 = scmp.ne.s32.totalorder %s68, %s69
    %p81 = scmp.eq.s32.totalorder %s17, 1
    %p82 = por %p80, %p81
    %p84 = scmp.ne.s32.totalorder %s69, %s83
    %p85 = scmp.eq.s32.totalorder %s17, 0
    %p86 = por %p84, %p85
    %s88 = sadd.s32 %s87, 1
    %p91 = scmp.eq.s32.totalorder %s11, 1
    %p92 = scmp.ne.s32.totalorder %s87, %s89
    %p93 = scmp.eq.s32.totalorder %s11, 0
    %p94 = por %p92, %p93
    %p95 = scmp.ne.s32.totalorder %s87, %s89
    %p96 = scmp.eq.s32.totalorder %s16, 1
    %p97 = por %p95, %p96
    %p98 = scmp.ne.s32.totalorder %s89, %s90
    %p99 = scmp.eq.s32.totalorder %s16, 0
    %p100 = por %p98, %p99
    %p101 = scmp.ne.s32.totalorder %s89, %s90
    %p102 = scmp.eq.s32.totalorder %s17, 1
    %p103 = por %p101, %p102
    %p105 = scmp.ne.s32.totalorder %s90, %s104
    %p106 = scmp.eq.s32.totalorder %s17, 0
    %p107 = por %p105, %p106
    %s109 = sadd.s32 %s108, 1
    %p112 = scmp.eq.s32.totalorder %s11, 1
    %p113 = scmp.ne.s32.totalorder %s108, %s110
    %p114 = scmp.eq.s32.totalorder %s11, 0
    %p115 = por %p113, %p114
    %p116 = scmp.ne.s32.totalorder %s108, %s110
    %p117 = scmp.eq.s32.totalorder %s16, 1
    %p118 = por %p116, %p117
    %p119 = scmp.ne.s32.totalorder %s110, %s111
    %p120 = scmp.eq.s32.totalorder %s16, 0
    %p121 = por %p119, %p120
    %p122 = scmp.ne.s32.totalorder %s110, %s111
    %p123 = scmp.eq.s32.totalorder %s17, 1
    %p124 = por %p122, %p123
    %p126 = scmp.ne.s32.totalorder %s111, %s125
    %p127 = scmp.eq.s32.totalorder %s17, 0
    %p128 = por %p126, %p127
    %s129 = ssub.s32 %s11, %s18
    %p130 = scmp.eq.s32.totalorder %s129, 0
    %s132 = sadd.s32 %s131, 1
    %s133 = scalar_select %p130, %s131, %s132
    %p136 = pneg %p130
    %p137 = scmp.eq.s32.totalorder %s11, 1
    %p138 = por %p136, %p137
    %p139 = scmp.ne.s32.totalorder %s131, %s134
    %p140 = scmp.eq.s32.totalorder %s11, 0
    %p141 = por %p139, %p140
    %p142 = scmp.ne.s32.totalorder %s131, %s134
    %p143 = scmp.eq.s32.totalorder %s16, 1
    %p144 = por %p142, %p143
    %p145 = scmp.ne.s32.totalorder %s134, %s135
    %p146 = scmp.eq.s32.totalorder %s16, 0
    %p147 = por %p145, %p146
    %p148 = scmp.ne.s32.totalorder %s134, %s135
    %p149 = scmp.eq.s32.totalorder %s17, 1
    %p150 = por %p148, %p149
    %p152 = scmp.ne.s32.totalorder %s135, %s151
    %p153 = scmp.eq.s32.totalorder %s17, 0
    %p154 = por %p152, %p153
    %p155 = scmp.le.s32.totalorder 1, %s11
    %p156 = scmp.lt.s32.totalorder %s11, 3
    %p157 = pnand %p155, %p156
    %p158 = pneg %p157
    // Predicated region
    $region9: #{tpu_custom_call.1} parent=5 // pred_check
      _
    $region10: #{tpu_custom_call.1} parent=5 // pred_check_branch
      %160 = sbr.rel (%p157) target = $region12
    $region11: #{tpu_custom_call.1} parent=5 // pred_region
      %s161 = ssub.s32 %s11, 1
      // Predicated region
      $region13: #{tpu_custom_call.1} parent=11 // pred_check
        %p162 = pneg %p58
      $region14: #{tpu_custom_call.1} parent=11 // pred_check_branch
        %164 = sbr.rel (%p162) target = $region16
      $region15: #{tpu_custom_call.1} parent=11 // pred_region
        _
      $region16: #{tpu_custom_call.1} parent=11 // pred_fallthru
        _
      // Predicated region
      $region17: #{tpu_custom_call.1} parent=11 // pred_check
        %p165 = pneg %p79
      $region18: #{tpu_custom_call.1} parent=11 // pred_check_branch
        %167 = sbr.rel (%p165) target = $region20
      $region19: #{tpu_custom_call.1} parent=11 // pred_region
        _
      $region20: #{tpu_custom_call.1} parent=11 // pred_fallthru
        _
      // Predicated region
      $region21: #{tpu_custom_call.1} parent=11 // pred_check
        %p168 = pneg %p100
      $region22: #{tpu_custom_call.1} parent=11 // pred_check_branch
        %170 = sbr.rel (%p168) target = $region24
      $region23: #{tpu_custom_call.1} parent=11 // pred_region
        _
      $region24: #{tpu_custom_call.1} parent=11 // pred_fallthru
        _
      // Predicated region
      $region25: #{tpu_custom_call.1} parent=11 // pred_check
        %p171 = pneg %p121
      $region26: #{tpu_custom_call.1} parent=11 // pred_check_branch
        %173 = sbr.rel (%p171) target = $region28
      $region27: #{tpu_custom_call.1} parent=11 // pred_region
        _
      $region28: #{tpu_custom_call.1} parent=11 // pred_fallthru
        _
    $region12: #{tpu_custom_call.1} parent=5 // pred_fallthru
      _
    %p174 = scmp.lt.s32.totalorder %s11, 2
    // Predicated region
    $region29: #{tpu_custom_call.1} parent=5 // pred_check
      %p175 = pneg %p174
    $region30: #{tpu_custom_call.1} parent=5 // pred_check_branch
      %177 = sbr.rel (%p175) target = $region32
    $region31: #{tpu_custom_call.1} parent=5 // pred_region
      // Predicated region
      $region33: #{tpu_custom_call.1} parent=31 // pred_check
        %p178 = pneg %p31
      $region34: #{tpu_custom_call.1} parent=31 // pred_check_branch
        %180 = sbr.rel (%p178) target = $region36
      $region35: #{tpu_custom_call.1} parent=31 // pred_region
        %s181 = smul.u32 64, %s11
        %p182 = scmp.lt.s32.totalorder %s181, 127
        %s183 = scalar_select %p182, %s181, 127
        %s184 = smul.addr %s183, 8
        %s185 = scalar_lea.vmem %s0, %s184
        %s186 = smul.u32 64, %s11
      $region36: #{tpu_custom_call.1} parent=31 // pred_fallthru
        _
    $region32: #{tpu_custom_call.1} parent=5 // pred_fallthru
      _
    %p187 = scmp.le.s32.totalorder 1, %s11
    %p188 = scmp.lt.s32.totalorder %s11, 3
    %p189 = pnand %p187, %p188
    %p190 = pneg %p189
    // Predicated region
    $region37: #{tpu_custom_call.1} parent=5 // pred_check
      _
    $region38: #{tpu_custom_call.1} parent=5 // pred_check_branch
      %192 = sbr.rel (%p189) target = $region40
    $region39: #{tpu_custom_call.1} parent=5 // pred_region
      %s193 = ssub.s32 %s11, 1
      %s194 = smul.u32 64, %s16
      %p195 = scmp.lt.s32.totalorder %s194, 127
      %s196 = scalar_select %p195, %s194, 127
      %s197 = smul.addr %s196, 8
      %s198 = scalar_lea.vmem %s0, %s197
      %p199 = pneg %p37
      %p200 = pneg %p34
      %p201 = pneg %p58
      %p202 = pneg %p55
      %p203 = pneg %p79
      %p204 = pneg %p76
      %p205 = pneg %p100
      %p206 = pneg %p97
      %p207 = pneg %p121
      %p208 = pneg %p118
      %p209 = pneg %p147
      %p210 = pneg %p144
      %s211 = smul.u32 64, %s16
      %p212 = scmp.lt.s32.totalorder %s211, 127
      %s213 = scalar_select %p212, %s211, 127
      %s214 = smul.addr %s213, 8
      %s215 = scalar_lea.vmem %s5, %s214
      %s216 = smul.u32 64, %s16
      %p217 = scmp.lt.s32.totalorder %s216, 127
      %s218 = scalar_select %p217, %s216, 127
      %s219 = smul.addr %s218, 8
      %s220 = scalar_lea.vmem %s0, %s219
      %s221 = smul.u32 64, %s16
      %s222 = smul.u32 64, %s16
      %p223 = scmp.lt.s32.totalorder %s222, 127
      %s224 = scalar_select %p223, %s222, 127
      %s225 = smul.addr %s224, 8
      %s226 = scalar_lea.vmem %s5, %s225
      %s227 = smul.u32 64, %s16
      %v229 = vld [vmem:[%s220] sm:$0xff]
      %v230 = vld [vmem:[%s220 + $0x8] sm:$0xff]
      %v231 = vld [vmem:[%s220 + $0x10] sm:$0xff]
      %v232 = vld [vmem:[%s220 + $0x18] sm:$0xff]
      %v233 = vld [vmem:[%s220 + $0x20] sm:$0xff]
      %v234 = vld [vmem:[%s220 + $0x28] sm:$0xff]
      %v235 = vld [vmem:[%s220 + $0x30] sm:$0xff]
      %v236 = vld [vmem:[%s220 + $0x38] sm:$0xff]
      %v237 = vld [vmem:[%s220 + $0x40] sm:$0xff]
      %v238 = vld [vmem:[%s220 + $0x48] sm:$0xff]
      %v239 = vld [vmem:[%s220 + $0x50] sm:$0xff]
      %v240 = vld [vmem:[%s220 + $0x58] sm:$0xff]
      %v241 = vld [vmem:[%s220 + $0x60] sm:$0xff]
      %v242 = vld [vmem:[%s220 + $0x68] sm:$0xff]
      %v243 = vld [vmem:[%s220 + $0x70] sm:$0xff]
      %v244 = vld [vmem:[%s220 + $0x78] sm:$0xff]
      %v245 = vld [vmem:[%s220 + $0x80] sm:$0xff]
      %v246 = vld [vmem:[%s220 + $0x88] sm:$0xff]
      %v247 = vld [vmem:[%s220 + $0x90] sm:$0xff]
      %v248 = vld [vmem:[%s220 + $0x98] sm:$0xff]
      %v249 = vld [vmem:[%s220 + $0xa0] sm:$0xff]
      %v250 = vld [vmem:[%s220 + $0xa8] sm:$0xff]
      %v251 = vld [vmem:[%s220 + $0xb0] sm:$0xff]
      %v252 = vld [vmem:[%s220 + $0xb8] sm:$0xff]
      %v253 = vld [vmem:[%s220 + $0xc0] sm:$0xff]
      %v254 = vld [vmem:[%s220 + $0xc8] sm:$0xff]
      %v255 = vld [vmem:[%s220 + $0xd0] sm:$0xff]
      %v256 = vld [vmem:[%s220 + $0xd8] sm:$0xff]
      %v257 = vld [vmem:[%s220 + $0xe0] sm:$0xff]
      %v258 = vld [vmem:[%s220 + $0xe8] sm:$0xff]
      %v259 = vld [vmem:[%s220 + $0xf0] sm:$0xff]
      %v260 = vld [vmem:[%s220 + $0xf8] sm:$0xff]
      %v261 = vld [vmem:[%s220 + $0x100] sm:$0xff]
      %v262 = vld [vmem:[%s220 + $0x108] sm:$0xff]
      %v263 = vld [vmem:[%s220 + $0x110] sm:$0xff]
      %v264 = vld [vmem:[%s220 + $0x118] sm:$0xff]
      %v265 = vld [vmem:[%s220 + $0x120] sm:$0xff]
      %v266 = vld [vmem:[%s220 + $0x128] sm:$0xff]
      %v267 = vld [vmem:[%s220 + $0x130] sm:$0xff]
      %v268 = vld [vmem:[%s220 + $0x138] sm:$0xff]
      %v269 = vld [vmem:[%s220 + $0x140] sm:$0xff]
      %v270 = vld [vmem:[%s220 + $0x148] sm:$0xff]
      %v271 = vld [vmem:[%s220 + $0x150] sm:$0xff]
      %v272 = vld [vmem:[%s220 + $0x158] sm:$0xff]
      %v273 = vld [vmem:[%s220 + $0x160] sm:$0xff]
      %v274 = vld [vmem:[%s220 + $0x168] sm:$0xff]
      %v275 = vld [vmem:[%s220 + $0x170] sm:$0xff]
      %v276 = vld [vmem:[%s220 + $0x178] sm:$0xff]
      %v277 = vld [vmem:[%s220 + $0x180] sm:$0xff]
      %v278 = vld [vmem:[%s220 + $0x188] sm:$0xff]
      %v279 = vld [vmem:[%s220 + $0x190] sm:$0xff]
      %v280 = vld [vmem:[%s220 + $0x198] sm:$0xff]
      %v281 = vld [vmem:[%s220 + $0x1a0] sm:$0xff]
      %v282 = vld [vmem:[%s220 + $0x1a8] sm:$0xff]
      %v283 = vld [vmem:[%s220 + $0x1b0] sm:$0xff]
      %v284 = vld [vmem:[%s220 + $0x1b8] sm:$0xff]
      %v285 = vld [vmem:[%s220 + $0x1c0] sm:$0xff]
      %v286 = vld [vmem:[%s220 + $0x1c8] sm:$0xff]
      %v287 = vld [vmem:[%s220 + $0x1d0] sm:$0xff]
      %v288 = vld [vmem:[%s220 + $0x1d8] sm:$0xff]
      %v289 = vld [vmem:[%s220 + $0x1e0] sm:$0xff]
      %v290 = vld [vmem:[%s220 + $0x1e8] sm:$0xff]
      %v291 = vld [vmem:[%s220 + $0x1f0] sm:$0xff]
      %v292 = vld [vmem:[%s220 + $0x1f8] sm:$0xff]
      %v293 = vpack.c.bf16 %v230, %v229
      %v294 = vpack.c.bf16 %v232, %v231
      %v295 = vpack.c.bf16 %v234, %v233
      %v296 = vpack.c.bf16 %v236, %v235
      %v297 = vpack.c.bf16 %v238, %v237
      %v298 = vpack.c.bf16 %v240, %v239
      %v299 = vpack.c.bf16 %v242, %v241
      %v300 = vpack.c.bf16 %v244, %v243
      %v301 = vpack.c.bf16 %v246, %v245
      %v302 = vpack.c.bf16 %v248, %v247
      %v303 = vpack.c.bf16 %v250, %v249
      %v304 = vpack.c.bf16 %v252, %v251
      %v305 = vpack.c.bf16 %v254, %v253
      %v306 = vpack.c.bf16 %v256, %v255
      %v307 = vpack.c.bf16 %v258, %v257
      %v308 = vpack.c.bf16 %v260, %v259
      %v309 = vpack.c.bf16 %v262, %v261
      %v310 = vpack.c.bf16 %v264, %v263
      %v311 = vpack.c.bf16 %v266, %v265
      %v312 = vpack.c.bf16 %v268, %v267
      %v313 = vpack.c.bf16 %v270, %v269
      %v314 = vpack.c.bf16 %v272, %v271
      %v315 = vpack.c.bf16 %v274, %v273
      %v316 = vpack.c.bf16 %v276, %v275
      %v317 = vpack.c.bf16 %v278, %v277
      %v318 = vpack.c.bf16 %v280, %v279
      %v319 = vpack.c.bf16 %v282, %v281
      %v320 = vpack.c.bf16 %v284, %v283
      %v321 = vpack.c.bf16 %v286, %v285
      %v322 = vpack.c.bf16 %v288, %v287
      %v323 = vpack.c.bf16 %v290, %v289
      %v324 = vpack.c.bf16 %v292, %v291
      %v325 = vld [vmem:[%s1] sm:$0xf]
      %v326 = vld [vmem:[%s1 + $0x4] sm:$0xf]
      %v327 = vld [vmem:[%s1 + $0x8] sm:$0xf]
      %v328 = vld [vmem:[%s1 + $0xc] sm:$0xf]
      %v329 = vld [vmem:[%s2] sm:$0x1]
      %v331 = vlaneseq
      %v332 = vshrl.u32 %v331, 7
      %v333 = vsub.s32 0, %v332
      %v334 = vrot.slane %v329, %v333
      %v340 = vunpack.c.l.b16 %v325
      %v341 = vunpack.c.l.b16 %v326
      %v342 = vunpack.c.l.b16 %v327
      %v343 = vunpack.c.l.b16 %v328
      %v344 = vpack.c.b16 %v341, %v340
      %v345 = vpack.c.b16 %v343, %v342
      %vm348 = vcmask 261120
      %v350 = vsel %vm348, %v293, 0
      %v353 = vsel %vm348, %v294, 0
      %v356 = vsel %vm348, %v295, 0
      %v359 = vsel %vm348, %v296, 0
      %v362 = vsel %vm348, %v297, 0
      %v365 = vsel %vm348, %v298, 0
      %v368 = vsel %vm348, %v299, 0
      %v371 = vsel %vm348, %v300, 0
      %v374 = vsel %vm348, %v301, 0
      %v377 = vsel %vm348, %v302, 0
      %v380 = vsel %vm348, %v303, 0
      %v383 = vsel %vm348, %v304, 0
      %v386 = vsel %vm348, %v305, 0
      %v389 = vsel %vm348, %v306, 0
      %v392 = vsel %vm348, %v307, 0
      %v395 = vsel %vm348, %v308, 0
      %v398 = vsel %vm348, %v309, 0
      %v401 = vsel %vm348, %v310, 0
      %v404 = vsel %vm348, %v311, 0
      %v407 = vsel %vm348, %v312, 0
      %v410 = vsel %vm348, %v313, 0
      %v413 = vsel %vm348, %v314, 0
      %v416 = vsel %vm348, %v315, 0
      %v419 = vsel %vm348, %v316, 0
      %v422 = vsel %vm348, %v317, 0
      %v425 = vsel %vm348, %v318, 0
      %v428 = vsel %vm348, %v319, 0
      %v431 = vsel %vm348, %v320, 0
      %v434 = vsel %vm348, %v321, 0
      %v437 = vsel %vm348, %v322, 0
      %v440 = vsel %vm348, %v323, 0
      %v443 = vsel %vm348, %v324, 0
      %445 = vmatprep.subr.bf16.mxu0 0
      %446 = vmatpush1.bf16.msra.mxu0 %v344
      %447 = vmatprep.subr.bf16.mxu0 0
      %448 = vmatpush1.bf16.msra.mxu0 %v345
      %449 = vmatprep.subr.bf16.mxu0 0
      %450 = vmatpush1.bf16.msra.mxu0 0
      %451 = vmatprep.subr.bf16.mxu0 0
      %452 = vmatpush1.bf16.msra.mxu0 0
      %453 = vmatprep.subr.bf16.mxu0 0
      %454 = vmatpush1.bf16.msra.mxu0 0
      %455 = vmatprep.subr.bf16.mxu0 0
      %456 = vmatpush1.bf16.msra.mxu0 0
      %457 = vmatprep.subr.bf16.mxu0 0
      %458 = vmatpush1.bf16.msra.mxu0 0
      %459 = vmatprep.subr.bf16.mxu0 0
      %460 = vmatpush1.bf16.msra.mxu0 0
      %461 = vmatprep.subr.bf16.mxu0 0
      %462 = vmatpush1.bf16.msra.mxu0 0
      %463 = vmatprep.subr.bf16.mxu0 0
      %464 = vmatpush1.bf16.msra.mxu0 0
      %465 = vmatprep.subr.bf16.mxu0 0
      %466 = vmatpush1.bf16.msra.mxu0 0
      %467 = vmatprep.subr.bf16.mxu0 0
      %468 = vmatpush1.bf16.msra.mxu0 0
      %469 = vmatprep.subr.bf16.mxu0 0
      %470 = vmatpush1.bf16.msra.mxu0 0
      %471 = vmatprep.subr.bf16.mxu0 0
      %472 = vmatpush1.bf16.msra.mxu0 0
      %473 = vmatprep.subr.bf16.mxu0 0
      %474 = vmatpush1.bf16.msra.mxu0 0
      %475 = vmatprep.subr.bf16.mxu0 0
      %476 = vmatpush1.bf16.msra.mxu0 0
      %477 = vmatprep.mubr.bf16.mxu0 0
      %478 = vmatmul.mubr.bf16.gmra.mrb[0].mxu0 %v350
      %v479 = vpop.f32.mrb[0].mxu0
      %v480 = vadd.f32 %v334, %v479
      %v481 = vpop.f32.mrb[0].mxu0
      %v482 = vpop.f32.mrb[0].mxu0
      %v483 = vadd.f32 %v334, %v482
      %v484 = vpop.f32.mrb[0].mxu0
      %485 = vmatprep.mubr.bf16.mxu0 0
      %486 = vmatmul.mubr.bf16.gmra.mrb[0].mxu0 %v353
      %v487 = vpop.f32.mrb[0].mxu0
      %v488 = vadd.f32 %v334, %v487
      %v489 = vpop.f32.mrb[0].mxu0
      %v490 = vpop.f32.mrb[0].mxu0
      %v491 = vadd.f32 %v334, %v490
      %v492 = vpop.f32.mrb[0].mxu0
      %493 = vmatprep.mubr.bf16.mxu0 0
      %494 = vmatmul.mubr.bf16.gmra.mrb[0].mxu0 %v356
      %v495 = vpop.f32.mrb[0].mxu0
      %v496 = vadd.f32 %v334, %v495
      %v497 = vpop.f32.mrb[0].mxu0
      %v498 = vpop.f32.mrb[0].mxu0
      %v499 = vadd.f32 %v334, %v498
      %v500 = vpop.f32.mrb[0].mxu0
      %501 = vmatprep.mubr.bf16.mxu0 0
      %502 = vmatmul.mubr.bf16.gmra.mrb[0].mxu0 %v359
      %v503 = vpop.f32.mrb[0].mxu0
      %v504 = vadd.f32 %v334, %v503
      %v505 = vpop.f32.mrb[0].mxu0
      %v506 = vpop.f32.mrb[0].mxu0
      %v507 = vadd.f32 %v334, %v506
      %v508 = vpop.f32.mrb[0].mxu0
      %509 = vmatprep.mubr.bf16.mxu0 0
      %510 = vmatmul.mubr.bf16.gmra.mrb[0].mxu0 %v362
      %v511 = vpop.f32.mrb[0].mxu0
      %v512 = vadd.f32 %v334, %v511
      %v513 = vpop.f32.mrb[0].mxu0
      %v514 = vpop.f32.mrb[0].mxu0
      %v515 = vadd.f32 %v334, %v514
      %v516 = vpop.f32.mrb[0].mxu0
      %517 = vmatprep.mubr.bf16.mxu0 0
      %518 = vmatmul.mubr.bf16.gmra.mrb[0].mxu0 %v365
      %v519 = vpop.f32.mrb[0].mxu0
      %v520 = vadd.f32 %v334, %v519
      %v521 = vpop.f32.mrb[0].mxu0
      %v522 = vpop.f32.mrb[0].mxu0
      %v523 = vadd.f32 %v334, %v522
      %v524 = vpop.f32.mrb[0].mxu0
      %525 = vmatprep.mubr.bf16.mxu0 0
      %526 = vmatmul.mubr.bf16.gmra.mrb[0].mxu0 %v368
      %v527 = vpop.f32.mrb[0].mxu0
      %v528 = vadd.f32 %v334, %v527
      %v529 = vpop.f32.mrb[0].mxu0
      %v530 = vpop.f32.mrb[0].mxu0
      %v531 = vadd.f32 %v334, %v530
      %v532 = vpop.f32.mrb[0].mxu0
      %533 = vmatprep.mubr.bf16.mxu0 0
      %534 = vmatmul.mubr.bf16.gmra.mrb[0].mxu0 %v371
      %v535 = vpop.f32.mrb[0].mxu0
      %v536 = vadd.f32 %v334, %v535
      %v537 = vpop.f32.mrb[0].mxu0
      %v538 = vpop.f32.mrb[0].mxu0
      %v539 = vadd.f32 %v334, %v538
      %v540 = vpop.f32.mrb[0].mxu0
      %541 = vmatprep.mubr.bf16.mxu0 0
      %542 = vmatmul.mubr.bf16.gmra.mrb[0].mxu0 %v374
      %v543 = vpop.f32.mrb[0].mxu0
      %v544 = vadd.f32 %v334, %v543
      %v545 = vpop.f32.mrb[0].mxu0
      %v546 = vpop.f32.mrb[0].mxu0
      %v547 = vadd.f32 %v334, %v546
      %v548 = vpop.f32.mrb[0].mxu0
      %549 = vmatprep.mubr.bf16.mxu0 0
      %550 = vmatmul.mubr.bf16.gmra.mrb[0].mxu0 %v377
      %v551 = vpop.f32.mrb[0].mxu0
      %v552 = vadd.f32 %v334, %v551
      %v553 = vpop.f32.mrb[0].mxu0
      %v554 = vpop.f32.mrb[0].mxu0
      %v555 = vadd.f32 %v334, %v554
      %v556 = vpop.f32.mrb[0].mxu0
      %557 = vmatprep.mubr.bf16.mxu0 0
      %558 = vmatmul.mubr.bf16.gmra.mrb[0].mxu0 %v380
      %v559 = vpop.f32.mrb[0].mxu0
      %v560 = vadd.f32 %v334, %v559
      %v561 = vpop.f32.mrb[0].mxu0
      %v562 = vpop.f32.mrb[0].mxu0
      %v563 = vadd.f32 %v334, %v562
      %v564 = vpop.f32.mrb[0].mxu0
      %565 = vmatprep.mubr.bf16.mxu0 0
      %566 = vmatmul.mubr.bf16.gmra.mrb[0].mxu0 %v383
      %v567 = vpop.f32.mrb[0].mxu0
      %v568 = vadd.f32 %v334, %v567
      %v569 = vpop.f32.mrb[0].mxu0
      %v570 = vpop.f32.mrb[0].mxu0
      %v571 = vadd.f32 %v334, %v570
      %v572 = vpop.f32.mrb[0].mxu0
      %573 = vmatprep.mubr.bf16.mxu0 0
      %574 = vmatmul.mubr.bf16.gmra.mrb[0].mxu0 %v386
      %v575 = vpop.f32.mrb[0].mxu0
      %v576 = vadd.f32 %v334, %v575
      %v577 = vpop.f32.mrb[0].mxu0
      %v578 = vpop.f32.mrb[0].mxu0
      %v579 = vadd.f32 %v334, %v578
      %v580 = vpop.f32.mrb[0].mxu0
      %581 = vmatprep.mubr.bf16.mxu0 0
      %582 = vmatmul.mubr.bf16.gmra.mrb[0].mxu0 %v389
      %v583 = vpop.f32.mrb[0].mxu0
      %v584 = vadd.f32 %v334, %v583
      %v585 = vpop.f32.mrb[0].mxu0
      %v586 = vpop.f32.mrb[0].mxu0
      %v587 = vadd.f32 %v334, %v586
      %v588 = vpop.f32.mrb[0].mxu0
      %589 = vmatprep.mubr.bf16.mxu0 0
      %590 = vmatmul.mubr.bf16.gmra.mrb[0].mxu0 %v392
      %v591 = vpop.f32.mrb[0].mxu0
      %v592 = vadd.f32 %v334, %v591
      %v593 = vpop.f32.mrb[0].mxu0
      %v594 = vpop.f32.mrb[0].mxu0
      %v595 = vadd.f32 %v334, %v594
      %v596 = vpop.f32.mrb[0].mxu0
      %597 = vmatprep.mubr.bf16.mxu0 0
      %598 = vmatmul.mubr.bf16.gmra.mrb[0].mxu0 %v395
      %v599 = vpop.f32.mrb[0].mxu0
      %v600 = vadd.f32 %v334, %v599
      %v601 = vpop.f32.mrb[0].mxu0
      %v602 = vpop.f32.mrb[0].mxu0
      %v603 = vadd.f32 %v334, %v602
      %v604 = vpop.f32.mrb[0].mxu0
      %605 = vmatprep.mubr.bf16.mxu0 0
      %606 = vmatmul.mubr.bf16.gmra.mrb[0].mxu0 %v398
      %v607 = vpop.f32.mrb[0].mxu0
      %v608 = vadd.f32 %v334, %v607
      %v609 = vpop.f32.mrb[0].mxu0
      %v610 = vpop.f32.mrb[0].mxu0
      %v611 = vadd.f32 %v334, %v610
      %v612 = vpop.f32.mrb[0].mxu0
      %613 = vmatprep.mubr.bf16.mxu0 0
      %614 = vmatmul.mubr.bf16.gmra.mrb[0].mxu0 %v401
      %v615 = vpop.f32.mrb[0].mxu0
      %v616 = vadd.f32 %v334, %v615
      %v617 = vpop.f32.mrb[0].mxu0
      %v618 = vpop.f32.mrb[0].mxu0
      %v619 = vadd.f32 %v334, %v618
      %v620 = vpop.f32.mrb[0].mxu0
      %621 = vmatprep.mubr.bf16.mxu0 0
      %622 = vmatmul.mubr.bf16.gmra.mrb[0].mxu0 %v404
      %v623 = vpop.f32.mrb[0].mxu0
      %v624 = vadd.f32 %v334, %v623
      %v625 = vpop.f32.mrb[0].mxu0
      %v626 = vpop.f32.mrb[0].mxu0
      %v627 = vadd.f32 %v334, %v626
      %v628 = vpop.f32.mrb[0].mxu0
      %629 = vmatprep.mubr.bf16.mxu0 0
      %630 = vmatmul.mubr.bf16.gmra.mrb[0].mxu0 %v407
      %v631 = vpop.f32.mrb[0].mxu0
      %v632 = vadd.f32 %v334, %v631
      %v633 = vpop.f32.mrb[0].mxu0
      %v634 = vpop.f32.mrb[0].mxu0
      %v635 = vadd.f32 %v334, %v634
      %v636 = vpop.f32.mrb[0].mxu0
      %637 = vmatprep.mubr.bf16.mxu0 0
      %638 = vmatmul.mubr.bf16.gmra.mrb[0].mxu0 %v410
      %v639 = vpop.f32.mrb[0].mxu0
      %v640 = vadd.f32 %v334, %v639
      %v641 = vpop.f32.mrb[0].mxu0
      %v642 = vpop.f32.mrb[0].mxu0
      %v643 = vadd.f32 %v334, %v642
      %v644 = vpop.f32.mrb[0].mxu0
      %645 = vmatprep.mubr.bf16.mxu0 0
      %646 = vmatmul.mubr.bf16.gmra.mrb[0].mxu0 %v413
      %v647 = vpop.f32.mrb[0].mxu0
      %v648 = vadd.f32 %v334, %v647
      %v649 = vpop.f32.mrb[0].mxu0
      %v650 = vpop.f32.mrb[0].mxu0
      %v651 = vadd.f32 %v334, %v650
      %v652 = vpop.f32.mrb[0].mxu0
      %653 = vmatprep.mubr.bf16.mxu0 0
      %654 = vmatmul.mubr.bf16.gmra.mrb[0].mxu0 %v416
      %v655 = vpop.f32.mrb[0].mxu0
      %v656 = vadd.f32 %v334, %v655
      %v657 = vpop.f32.mrb[0].mxu0
      %v658 = vpop.f32.mrb[0].mxu0
      %v659 = vadd.f32 %v334, %v658
      %v660 = vpop.f32.mrb[0].mxu0
      %661 = vmatprep.mubr.bf16.mxu0 0
      %662 = vmatmul.mubr.bf16.gmra.mrb[0].mxu0 %v419
      %v663 = vpop.f32.mrb[0].mxu0
      %v664 = vadd.f32 %v334, %v663
      %v665 = vpop.f32.mrb[0].mxu0
      %v666 = vpop.f32.mrb[0].mxu0
      %v667 = vadd.f32 %v334, %v666
      %v668 = vpop.f32.mrb[0].mxu0
      %669 = vmatprep.mubr.bf16.mxu0 0
      %670 = vmatmul.mubr.bf16.gmra.mrb[0].mxu0 %v422
      %v671 = vpop.f32.mrb[0].mxu0
      %v672 = vadd.f32 %v334, %v671
      %v673 = vpop.f32.mrb[0].mxu0
      %v674 = vpop.f32.mrb[0].mxu0
      %v675 = vadd.f32 %v334, %v674
      %v676 = vpop.f32.mrb[0].mxu0
      %677 = vmatprep.mubr.bf16.mxu0 0
      %678 = vmatmul.mubr.bf16.gmra.mrb[0].mxu0 %v425
      %v679 = vpop.f32.mrb[0].mxu0
      %v680 = vadd.f32 %v334, %v679
      %v681 = vpop.f32.mrb[0].mxu0
      %v682 = vpop.f32.mrb[0].mxu0
      %v683 = vadd.f32 %v334, %v682
      %v684 = vpop.f32.mrb[0].mxu0
      %685 = vmatprep.mubr.bf16.mxu0 0
      %686 = vmatmul.mubr.bf16.gmra.mrb[0].mxu0 %v428
      %v687 = vpop.f32.mrb[0].mxu0
      %v688 = vadd.f32 %v334, %v687
      %v689 = vpop.f32.mrb[0].mxu0
      %v690 = vpop.f32.mrb[0].mxu0
      %v691 = vadd.f32 %v334, %v690
      %v692 = vpop.f32.mrb[0].mxu0
      %693 = vmatprep.mubr.bf16.mxu0 0
      %694 = vmatmul.mubr.bf16.gmra.mrb[0].mxu0 %v431
      %v695 = vpop.f32.mrb[0].mxu0
      %v696 = vadd.f32 %v334, %v695
      %v697 = vpop.f32.mrb[0].mxu0
      %v698 = vpop.f32.mrb[0].mxu0
      %v699 = vadd.f32 %v334, %v698
      %v700 = vpop.f32.mrb[0].mxu0
      %701 = vmatprep.mubr.bf16.mxu0 0
      %702 = vmatmul.mubr.bf16.gmra.mrb[0].mxu0 %v434
      %v703 = vpop.f32.mrb[0].mxu0
      %v704 = vadd.f32 %v334, %v703
      %v705 = vpop.f32.mrb[0].mxu0
      %v706 = vpop.f32.mrb[0].mxu0
      %v707 = vadd.f32 %v334, %v706
      %v708 = vpop.f32.mrb[0].mxu0
      %709 = vmatprep.mubr.bf16.mxu0 0
      %710 = vmatmul.mubr.bf16.gmra.mrb[0].mxu0 %v437
      %v711 = vpop.f32.mrb[0].mxu0
      %v712 = vadd.f32 %v334, %v711
      %v713 = vpop.f32.mrb[0].mxu0
      %v714 = vpop.f32.mrb[0].mxu0
      %v715 = vadd.f32 %v334, %v714
      %v716 = vpop.f32.mrb[0].mxu0
      %717 = vmatprep.mubr.bf16.mxu0 0
      %718 = vmatmul.mubr.bf16.gmra.mrb[0].mxu0 %v440
      %v719 = vpop.f32.mrb[0].mxu0
      %v720 = vadd.f32 %v334, %v719
      %v721 = vpop.f32.mrb[0].mxu0
      %v722 = vpop.f32.mrb[0].mxu0
      %v723 = vadd.f32 %v334, %v722
      %v724 = vpop.f32.mrb[0].mxu0
      %725 = vmatprep.mubr.bf16.mxu0 0
      %726 = vmatmul.mubr.bf16.gmra.mrb[0].mxu0 %v443
      %v727 = vpop.f32.mrb[0].mxu0
      %v728 = vadd.f32 %v334, %v727
      %v729 = vpop.f32.mrb[0].mxu0
      %v730 = vpop.f32.mrb[0].mxu0
      %v731 = vadd.f32 %v334, %v730
      %v732 = vpop.f32.mrb[0].mxu0
      %733 = vdwg.mxu0
      %v734 = vmax.f32 %v480, 0.0
      %v735 = vmax.f32 %v483, 0.0
      %v736 = vmax.f32 %v488, 0.0
      %v737 = vmax.f32 %v491, 0.0
      %v738 = vmax.f32 %v496, 0.0
      %v739 = vmax.f32 %v499, 0.0
      %v740 = vmax.f32 %v504, 0.0
      %v741 = vmax.f32 %v507, 0.0
      %v742 = vmax.f32 %v512, 0.0
      %v743 = vmax.f32 %v515, 0.0
      %v744 = vmax.f32 %v520, 0.0
      %v745 = vmax.f32 %v523, 0.0
      %v746 = vmax.f32 %v528, 0.0
      %v747 = vmax.f32 %v531, 0.0
      %v748 = vmax.f32 %v536, 0.0
      %v749 = vmax.f32 %v539, 0.0
      %v750 = vmax.f32 %v544, 0.0
      %v751 = vmax.f32 %v547, 0.0
      %v752 = vmax.f32 %v552, 0.0
      %v753 = vmax.f32 %v555, 0.0
      %v754 = vmax.f32 %v560, 0.0
      %v755 = vmax.f32 %v563, 0.0
      %v756 = vmax.f32 %v568, 0.0
      %v757 = vmax.f32 %v571, 0.0
      %v758 = vmax.f32 %v576, 0.0
      %v759 = vmax.f32 %v579, 0.0
      %v760 = vmax.f32 %v584, 0.0
      %v761 = vmax.f32 %v587, 0.0
      %v762 = vmax.f32 %v592, 0.0
      %v763 = vmax.f32 %v595, 0.0
      %v764 = vmax.f32 %v600, 0.0
      %v765 = vmax.f32 %v603, 0.0
      %v766 = vmax.f32 %v608, 0.0
      %v767 = vmax.f32 %v611, 0.0
      %v768 = vmax.f32 %v616, 0.0
      %v769 = vmax.f32 %v619, 0.0
      %v770 = vmax.f32 %v624, 0.0
      %v771 = vmax.f32 %v627, 0.0
      %v772 = vmax.f32 %v632, 0.0
      %v773 = vmax.f32 %v635, 0.0
      %v774 = vmax.f32 %v640, 0.0
      %v775 = vmax.f32 %v643, 0.0
      %v776 = vmax.f32 %v648, 0.0
      %v777 = vmax.f32 %v651, 0.0
      %v778 = vmax.f32 %v656, 0.0
      %v779 = vmax.f32 %v659, 0.0
      %v780 = vmax.f32 %v664, 0.0
      %v781 = vmax.f32 %v667, 0.0
      %v782 = vmax.f32 %v672, 0.0
      %v783 = vmax.f32 %v675, 0.0
      %v784 = vmax.f32 %v680, 0.0
      %v785 = vmax.f32 %v683, 0.0
      %v786 = vmax.f32 %v688, 0.0
      %v787 = vmax.f32 %v691, 0.0
      %v788 = vmax.f32 %v696, 0.0
      %v789 = vmax.f32 %v699, 0.0
      %v790 = vmax.f32 %v704, 0.0
      %v791 = vmax.f32 %v707, 0.0
      %v792 = vmax.f32 %v712, 0.0
      %v793 = vmax.f32 %v715, 0.0
      %v794 = vmax.f32 %v720, 0.0
      %v795 = vmax.f32 %v723, 0.0
      %v796 = vmax.f32 %v728, 0.0
      %v797 = vmax.f32 %v731, 0.0
      %v798 = vpack.c.bf16 %v735, %v734
      %v799 = vpack.c.bf16 %v737, %v736
      %v800 = vpack.c.bf16 %v739, %v738
      %v801 = vpack.c.bf16 %v741, %v740
      %v802 = vpack.c.bf16 %v743, %v742
      %v803 = vpack.c.bf16 %v745, %v744
      %v804 = vpack.c.bf16 %v747, %v746
      %v805 = vpack.c.bf16 %v749, %v748
      %v806 = vpack.c.bf16 %v751, %v750
      %v807 = vpack.c.bf16 %v753, %v752
      %v808 = vpack.c.bf16 %v755, %v754
      %v809 = vpack.c.bf16 %v757, %v756
      %v810 = vpack.c.bf16 %v759, %v758
      %v811 = vpack.c.bf16 %v761, %v760
      %v812 = vpack.c.bf16 %v763, %v762
      %v813 = vpack.c.bf16 %v765, %v764
      %v814 = vpack.c.bf16 %v767, %v766
      %v815 = vpack.c.bf16 %v769, %v768
      %v816 = vpack.c.bf16 %v771, %v770
      %v817 = vpack.c.bf16 %v773, %v772
      %v818 = vpack.c.bf16 %v775, %v774
      %v819 = vpack.c.bf16 %v777, %v776
      %v820 = vpack.c.bf16 %v779, %v778
      %v821 = vpack.c.bf16 %v781, %v780
      %v822 = vpack.c.bf16 %v783, %v782
      %v823 = vpack.c.bf16 %v785, %v784
      %v824 = vpack.c.bf16 %v787, %v786
      %v825 = vpack.c.bf16 %v789, %v788
      %v826 = vpack.c.bf16 %v791, %v790
      %v827 = vpack.c.bf16 %v793, %v792
      %v828 = vpack.c.bf16 %v795, %v794
      %v829 = vpack.c.bf16 %v797, %v796
      %v830 = vld [vmem:[%s3] sm:$0xf]
      %v831 = vld [vmem:[%s3 + $0x4] sm:$0xf]
      %v832 = vld [vmem:[%s3 + $0x8] sm:$0xf]
      %v833 = vld [vmem:[%s3 + $0xc] sm:$0xf]
      %v834 = vld [vmem:[%s3 + $0x10] sm:$0xf]
      %v835 = vld [vmem:[%s3 + $0x14] sm:$0xf]
      %v836 = vld [vmem:[%s3 + $0x18] sm:$0xf]
      %v837 = vld [vmem:[%s3 + $0x1c] sm:$0xf]
      %v838 = vld [vmem:[%s4] sm:$0x1]
      %v840 = vlaneseq
      %v841 = vshrl.u32 %v840, 7
      %v842 = vsub.s32 0, %v841
      %v843 = vrot.slane %v838, %v842
      %v853 = vunpack.c.l.b16 %v830
      %v854 = vunpack.c.l.b16 %v831
      %v855 = vunpack.c.l.b16 %v832
      %v856 = vunpack.c.l.b16 %v833
      %v857 = vunpack.c.l.b16 %v834
      %v858 = vunpack.c.l.b16 %v835
      %v859 = vunpack.c.l.b16 %v836
      %v860 = vunpack.c.l.b16 %v837
      %v861 = vpack.c.b16 %v854, %v853
      %v862 = vpack.c.b16 %v856, %v855
      %v863 = vpack.c.b16 %v858, %v857
      %v864 = vpack.c.b16 %v860, %v859
      %vm869 = vcmask 523264
      %v871 = vsel %vm869, %v798, 0
      %v874 = vsel %vm869, %v799, 0
      %v877 = vsel %vm869, %v800, 0
      %v880 = vsel %vm869, %v801, 0
      %v883 = vsel %vm869, %v802, 0
      %v886 = vsel %vm869, %v803, 0
      %v889 = vsel %vm869, %v804, 0
      %v892 = vsel %vm869, %v805, 0
      %v895 = vsel %vm869, %v806, 0
      %v898 = vsel %vm869, %v807, 0
      %v901 = vsel %vm869, %v808, 0
      %v904 = vsel %vm869, %v809, 0
      %v907 = vsel %vm869, %v810, 0
      %v910 = vsel %vm869, %v811, 0
      %v913 = vsel %vm869, %v812, 0
      %v916 = vsel %vm869, %v813, 0
      %v919 = vsel %vm869, %v814, 0
      %v922 = vsel %vm869, %v815, 0
      %v925 = vsel %vm869, %v816, 0
      %v928 = vsel %vm869, %v817, 0
      %v931 = vsel %vm869, %v818, 0
      %v934 = vsel %vm869, %v819, 0
      %v937 = vsel %vm869, %v820, 0
      %v940 = vsel %vm869, %v821, 0
      %v943 = vsel %vm869, %v822, 0
      %v946 = vsel %vm869, %v823, 0
      %v949 = vsel %vm869, %v824, 0
      %v952 = vsel %vm869, %v825, 0
      %v955 = vsel %vm869, %v826, 0
      %v958 = vsel %vm869, %v827, 0
      %v961 = vsel %vm869, %v828, 0
      %v964 = vsel %vm869, %v829, 0
      %966 = vmatprep.subr.bf16.mxu0 0
      %967 = vmatpush1.bf16.msra.mxu0 %v861
      %968 = vmatprep.subr.bf16.mxu0 0
      %969 = vmatpush1.bf16.msra.mxu0 %v862
      %970 = vmatprep.subr.bf16.mxu0 0
      %971 = vmatpush1.bf16.msra.mxu0 %v863
      %972 = vmatprep.subr.bf16.mxu0 0
      %973 = vmatpush1.bf16.msra.mxu0 %v864
      %974 = vmatprep.subr.bf16.mxu0 0
      %975 = vmatpush1.bf16.msra.mxu0 0
      %976 = vmatprep.subr.bf16.mxu0 0
      %977 = vmatpush1.bf16.msra.mxu0 0
      %978 = vmatprep.subr.bf16.mxu0 0
      %979 = vmatpush1.bf16.msra.mxu0 0
      %980 = vmatprep.subr.bf16.mxu0 0
      %981 = vmatpush1.bf16.msra.mxu0 0
      %982 = vmatprep.subr.bf16.mxu0 0
      %983 = vmatpush1.bf16.msra.mxu0 0
      %984 = vmatprep.subr.bf16.mxu0 0
      %985 = vmatpush1.bf16.msra.mxu0 0
      %986 = vmatprep.subr.bf16.mxu0 0
      %987 = vmatpush1.bf16.msra.mxu0 0
      %988 = vmatprep.subr.bf16.mxu0 0
      %989 = vmatpush1.bf16.msra.mxu0 0
      %990 = vmatprep.subr.bf16.mxu0 0
      %991 = vmatpush1.bf16.msra.mxu0 0
      %992 = vmatprep.subr.bf16.mxu0 0
      %993 = vmatpush1.bf16.msra.mxu0 0
      %994 = vmatprep.subr.bf16.mxu0 0
      %995 = vmatpush1.bf16.msra.mxu0 0
      %996 = vmatprep.subr.bf16.mxu0 0
      %997 = vmatpush1.bf16.msra.mxu0 0
      %998 = vmatprep.mubr.bf16.mxu0 0
      %999 = vmatmul.mubr.bf16.gmra.mrb[0].mxu0 %v871
      %v1000 = vpop.f32.mrb[0].mxu0
      %v1001 = vadd.f32 %v843, %v1000
      %v1002 = vpop.f32.mrb[0].mxu0
      %v1003 = vpop.f32.mrb[0].mxu0
      %v1004 = vadd.f32 %v843, %v1003
      %v1005 = vpop.f32.mrb[0].mxu0
      %1006 = vmatprep.mubr.bf16.mxu0 0
      %1007 = vmatmul.mubr.bf16.gmra.mrb[0].mxu0 %v874
      %v1008 = vpop.f32.mrb[0].mxu0
      %v1009 = vadd.f32 %v843, %v1008
      %v1010 = vpop.f32.mrb[0].mxu0
      %v1011 = vpop.f32.mrb[0].mxu0
      %v1012 = vadd.f32 %v843, %v1011
      %v1013 = vpop.f32.mrb[0].mxu0
      %1014 = vmatprep.mubr.bf16.mxu0 0
      %1015 = vmatmul.mubr.bf16.gmra.mrb[0].mxu0 %v877
      %v1016 = vpop.f32.mrb[0].mxu0
      %v1017 = vadd.f32 %v843, %v1016
      %v1018 = vpop.f32.mrb[0].mxu0
      %v1019 = vpop.f32.mrb[0].mxu0
      %v1020 = vadd.f32 %v843, %v1019
      %v1021 = vpop.f32.mrb[0].mxu0
      %1022 = vmatprep.mubr.bf16.mxu0 0
      %1023 = vmatmul.mubr.bf16.gmra.mrb[0].mxu0 %v880
      %v1024 = vpop.f32.mrb[0].mxu0
      %v1025 = vadd.f32 %v843, %v1024
      %v1026 = vpop.f32.mrb[0].mxu0
      %v1027 = vpop.f32.mrb[0].mxu0
      %v1028 = vadd.f32 %v843, %v1027
      %v1029 = vpop.f32.mrb[0].mxu0
      %1030 = vmatprep.mubr.bf16.mxu0 0
      %1031 = vmatmul.mubr.bf16.gmra.mrb[0].mxu0 %v883
      %v1032 = vpop.f32.mrb[0].mxu0
      %v1033 = vadd.f32 %v843, %v1032
      %v1034 = vpop.f32.mrb[0].mxu0
      %v1035 = vpop.f32.mrb[0].mxu0
      %v1036 = vadd.f32 %v843, %v1035
      %v1037 = vpop.f32.mrb[0].mxu0
      %1038 = vmatprep.mubr.bf16.mxu0 0
      %1039 = vmatmul.mubr.bf16.gmra.mrb[0].mxu0 %v886
      %v1040 = vpop.f32.mrb[0].mxu0
      %v1041 = vadd.f32 %v843, %v1040
      %v1042 = vpop.f32.mrb[0].mxu0
      %v1043 = vpop.f32.mrb[0].mxu0
      %v1044 = vadd.f32 %v843, %v1043
      %v1045 = vpop.f32.mrb[0].mxu0
      %1046 = vmatprep.mubr.bf16.mxu0 0
      %1047 = vmatmul.mubr.bf16.gmra.mrb[0].mxu0 %v889
      %v1048 = vpop.f32.mrb[0].mxu0
      %v1049 = vadd.f32 %v843, %v1048
      %v1050 = vpop.f32.mrb[0].mxu0
      %v1051 = vpop.f32.mrb[0].mxu0
      %v1052 = vadd.f32 %v843, %v1051
      %v1053 = vpop.f32.mrb[0].mxu0
      %1054 = vmatprep.mubr.bf16.mxu0 0
      %1055 = vmatmul.mubr.bf16.gmra.mrb[0].mxu0 %v892
      %v1056 = vpop.f32.mrb[0].mxu0
      %v1057 = vadd.f32 %v843, %v1056
      %v1058 = vpop.f32.mrb[0].mxu0
      %v1059 = vpop.f32.mrb[0].mxu0
      %v1060 = vadd.f32 %v843, %v1059
      %v1061 = vpop.f32.mrb[0].mxu0
      %1062 = vmatprep.mubr.bf16.mxu0 0
      %1063 = vmatmul.mubr.bf16.gmra.mrb[0].mxu0 %v895
      %v1064 = vpop.f32.mrb[0].mxu0
      %v1065 = vadd.f32 %v843, %v1064
      %v1066 = vpop.f32.mrb[0].mxu0
      %v1067 = vpop.f32.mrb[0].mxu0
      %v1068 = vadd.f32 %v843, %v1067
      %v1069 = vpop.f32.mrb[0].mxu0
      %1070 = vmatprep.mubr.bf16.mxu0 0
      %1071 = vmatmul.mubr.bf16.gmra.mrb[0].mxu0 %v898
      %v1072 = vpop.f32.mrb[0].mxu0
      %v1073 = vadd.f32 %v843, %v1072
      %v1074 = vpop.f32.mrb[0].mxu0
      %v1075 = vpop.f32.mrb[0].mxu0
      %v1076 = vadd.f32 %v843, %v1075
      %v1077 = vpop.f32.mrb[0].mxu0
      %1078 = vmatprep.mubr.bf16.mxu0 0
      %1079 = vmatmul.mubr.bf16.gmra.mrb[0].mxu0 %v901
      %v1080 = vpop.f32.mrb[0].mxu0
      %v1081 = vadd.f32 %v843, %v1080
      %v1082 = vpop.f32.mrb[0].mxu0
      %v1083 = vpop.f32.mrb[0].mxu0
      %v1084 = vadd.f32 %v843, %v1083
      %v1085 = vpop.f32.mrb[0].mxu0
      %1086 = vmatprep.mubr.bf16.mxu0 0
      %1087 = vmatmul.mubr.bf16.gmra.mrb[0].mxu0 %v904
      %v1088 = vpop.f32.mrb[0].mxu0
      %v1089 = vadd.f32 %v843, %v1088
      %v1090 = vpop.f32.mrb[0].mxu0
      %v1091 = vpop.f32.mrb[0].mxu0
      %v1092 = vadd.f32 %v843, %v1091
      %v1093 = vpop.f32.mrb[0].mxu0
      %1094 = vmatprep.mubr.bf16.mxu0 0
      %1095 = vmatmul.mubr.bf16.gmra.mrb[0].mxu0 %v907
      %v1096 = vpop.f32.mrb[0].mxu0
      %v1097 = vadd.f32 %v843, %v1096
      %v1098 = vpop.f32.mrb[0].mxu0
      %v1099 = vpop.f32.mrb[0].mxu0
      %v1100 = vadd.f32 %v843, %v1099
      %v1101 = vpop.f32.mrb[0].mxu0
      %1102 = vmatprep.mubr.bf16.mxu0 0
      %1103 = vmatmul.mubr.bf16.gmra.mrb[0].mxu0 %v910
      %v1104 = vpop.f32.mrb[0].mxu0
      %v1105 = vadd.f32 %v843, %v1104
      %v1106 = vpop.f32.mrb[0].mxu0
      %v1107 = vpop.f32.mrb[0].mxu0
      %v1108 = vadd.f32 %v843, %v1107
      %v1109 = vpop.f32.mrb[0].mxu0
      %1110 = vmatprep.mubr.bf16.mxu0 0
      %1111 = vmatmul.mubr.bf16.gmra.mrb[0].mxu0 %v913
      %v1112 = vpop.f32.mrb[0].mxu0
      %v1113 = vadd.f32 %v843, %v1112
      %v1114 = vpop.f32.mrb[0].mxu0
      %v1115 = vpop.f32.mrb[0].mxu0
      %v1116 = vadd.f32 %v843, %v1115
      %v1117 = vpop.f32.mrb[0].mxu0
      %1118 = vmatprep.mubr.bf16.mxu0 0
      %1119 = vmatmul.mubr.bf16.gmra.mrb[0].mxu0 %v916
      %v1120 = vpop.f32.mrb[0].mxu0
      %v1121 = vadd.f32 %v843, %v1120
      %v1122 = vpop.f32.mrb[0].mxu0
      %v1123 = vpop.f32.mrb[0].mxu0
      %v1124 = vadd.f32 %v843, %v1123
      %v1125 = vpop.f32.mrb[0].mxu0
      %1126 = vmatprep.mubr.bf16.mxu0 0
      %1127 = vmatmul.mubr.bf16.gmra.mrb[0].mxu0 %v919
      %v1128 = vpop.f32.mrb[0].mxu0
      %v1129 = vadd.f32 %v843, %v1128
      %v1130 = vpop.f32.mrb[0].mxu0
      %v1131 = vpop.f32.mrb[0].mxu0
      %v1132 = vadd.f32 %v843, %v1131
      %v1133 = vpop.f32.mrb[0].mxu0
      %1134 = vmatprep.mubr.bf16.mxu0 0
      %1135 = vmatmul.mubr.bf16.gmra.mrb[0].mxu0 %v922
      %v1136 = vpop.f32.mrb[0].mxu0
      %v1137 = vadd.f32 %v843, %v1136
      %v1138 = vpop.f32.mrb[0].mxu0
      %v1139 = vpop.f32.mrb[0].mxu0
      %v1140 = vadd.f32 %v843, %v1139
      %v1141 = vpop.f32.mrb[0].mxu0
      %1142 = vmatprep.mubr.bf16.mxu0 0
      %1143 = vmatmul.mubr.bf16.gmra.mrb[0].mxu0 %v925
      %v1144 = vpop.f32.mrb[0].mxu0
      %v1145 = vadd.f32 %v843, %v1144
      %v1146 = vpop.f32.mrb[0].mxu0
      %v1147 = vpop.f32.mrb[0].mxu0
      %v1148 = vadd.f32 %v843, %v1147
      %v1149 = vpop.f32.mrb[0].mxu0
      %1150 = vmatprep.mubr.bf16.mxu0 0
      %1151 = vmatmul.mubr.bf16.gmra.mrb[0].mxu0 %v928
      %v1152 = vpop.f32.mrb[0].mxu0
      %v1153 = vadd.f32 %v843, %v1152
      %v1154 = vpop.f32.mrb[0].mxu0
      %v1155 = vpop.f32.mrb[0].mxu0
      %v1156 = vadd.f32 %v843, %v1155
      %v1157 = vpop.f32.mrb[0].mxu0
      %1158 = vmatprep.mubr.bf16.mxu0 0
      %1159 = vmatmul.mubr.bf16.gmra.mrb[0].mxu0 %v931
      %v1160 = vpop.f32.mrb[0].mxu0
      %v1161 = vadd.f32 %v843, %v1160
      %v1162 = vpop.f32.mrb[0].mxu0
      %v1163 = vpop.f32.mrb[0].mxu0
      %v1164 = vadd.f32 %v843, %v1163
      %v1165 = vpop.f32.mrb[0].mxu0
      %1166 = vmatprep.mubr.bf16.mxu0 0
      %1167 = vmatmul.mubr.bf16.gmra.mrb[0].mxu0 %v934
      %v1168 = vpop.f32.mrb[0].mxu0
      %v1169 = vadd.f32 %v843, %v1168
      %v1170 = vpop.f32.mrb[0].mxu0
      %v1171 = vpop.f32.mrb[0].mxu0
      %v1172 = vadd.f32 %v843, %v1171
      %v1173 = vpop.f32.mrb[0].mxu0
      %1174 = vmatprep.mubr.bf16.mxu0 0
      %1175 = vmatmul.mubr.bf16.gmra.mrb[0].mxu0 %v937
      %v1176 = vpop.f32.mrb[0].mxu0
      %v1177 = vadd.f32 %v843, %v1176
      %v1178 = vpop.f32.mrb[0].mxu0
      %v1179 = vpop.f32.mrb[0].mxu0
      %v1180 = vadd.f32 %v843, %v1179
      %v1181 = vpop.f32.mrb[0].mxu0
      %1182 = vmatprep.mubr.bf16.mxu0 0
      %1183 = vmatmul.mubr.bf16.gmra.mrb[0].mxu0 %v940
      %v1184 = vpop.f32.mrb[0].mxu0
      %v1185 = vadd.f32 %v843, %v1184
      %v1186 = vpop.f32.mrb[0].mxu0
      %v1187 = vpop.f32.mrb[0].mxu0
      %v1188 = vadd.f32 %v843, %v1187
      %v1189 = vpop.f32.mrb[0].mxu0
      %1190 = vmatprep.mubr.bf16.mxu0 0
      %1191 = vmatmul.mubr.bf16.gmra.mrb[0].mxu0 %v943
      %v1192 = vpop.f32.mrb[0].mxu0
      %v1193 = vadd.f32 %v843, %v1192
      %v1194 = vpop.f32.mrb[0].mxu0
      %v1195 = vpop.f32.mrb[0].mxu0
      %v1196 = vadd.f32 %v843, %v1195
      %v1197 = vpop.f32.mrb[0].mxu0
      %1198 = vmatprep.mubr.bf16.mxu0 0
      %1199 = vmatmul.mubr.bf16.gmra.mrb[0].mxu0 %v946
      %v1200 = vpop.f32.mrb[0].mxu0
      %v1201 = vadd.f32 %v843, %v1200
      %v1202 = vpop.f32.mrb[0].mxu0
      %v1203 = vpop.f32.mrb[0].mxu0
      %v1204 = vadd.f32 %v843, %v1203
      %v1205 = vpop.f32.mrb[0].mxu0
      %1206 = vmatprep.mubr.bf16.mxu0 0
      %1207 = vmatmul.mubr.bf16.gmra.mrb[0].mxu0 %v949
      %v1208 = vpop.f32.mrb[0].mxu0
      %v1209 = vadd.f32 %v843, %v1208
      %v1210 = vpop.f32.mrb[0].mxu0
      %v1211 = vpop.f32.mrb[0].mxu0
      %v1212 = vadd.f32 %v843, %v1211
      %v1213 = vpop.f32.mrb[0].mxu0
      %1214 = vmatprep.mubr.bf16.mxu0 0
      %1215 = vmatmul.mubr.bf16.gmra.mrb[0].mxu0 %v952
      %v1216 = vpop.f32.mrb[0].mxu0
      %v1217 = vadd.f32 %v843, %v1216
      %v1218 = vpop.f32.mrb[0].mxu0
      %v1219 = vpop.f32.mrb[0].mxu0
      %v1220 = vadd.f32 %v843, %v1219
      %v1221 = vpop.f32.mrb[0].mxu0
      %1222 = vmatprep.mubr.bf16.mxu0 0
      %1223 = vmatmul.mubr.bf16.gmra.mrb[0].mxu0 %v955
      %v1224 = vpop.f32.mrb[0].mxu0
      %v1225 = vadd.f32 %v843, %v1224
      %v1226 = vpop.f32.mrb[0].mxu0
      %v1227 = vpop.f32.mrb[0].mxu0
      %v1228 = vadd.f32 %v843, %v1227
      %v1229 = vpop.f32.mrb[0].mxu0
      %1230 = vmatprep.mubr.bf16.mxu0 0
      %1231 = vmatmul.mubr.bf16.gmra.mrb[0].mxu0 %v958
      %v1232 = vpop.f32.mrb[0].mxu0
      %v1233 = vadd.f32 %v843, %v1232
      %v1234 = vpop.f32.mrb[0].mxu0
      %v1235 = vpop.f32.mrb[0].mxu0
      %v1236 = vadd.f32 %v843, %v1235
      %v1237 = vpop.f32.mrb[0].mxu0
      %1238 = vmatprep.mubr.bf16.mxu0 0
      %1239 = vmatmul.mubr.bf16.gmra.mrb[0].mxu0 %v961
      %v1240 = vpop.f32.mrb[0].mxu0
      %v1241 = vadd.f32 %v843, %v1240
      %v1242 = vpop.f32.mrb[0].mxu0
      %v1243 = vpop.f32.mrb[0].mxu0
      %v1244 = vadd.f32 %v843, %v1243
      %v1245 = vpop.f32.mrb[0].mxu0
      %1246 = vmatprep.mubr.bf16.mxu0 0
      %1247 = vmatmul.mubr.bf16.gmra.mrb[0].mxu0 %v964
      %v1248 = vpop.f32.mrb[0].mxu0
      %v1249 = vadd.f32 %v843, %v1248
      %v1250 = vpop.f32.mrb[0].mxu0
      %v1251 = vpop.f32.mrb[0].mxu0
      %v1252 = vadd.f32 %v843, %v1251
      %v1253 = vpop.f32.mrb[0].mxu0
      %1254 = vdwg.mxu0
      %vm1255 = vcmask 64512
      %1256 = vst.msk [vmem:[%s226] sm:$0xff] %vm1255, %v1001
      %1257 = vst.msk [vmem:[%s226 + $0x8] sm:$0xff] %vm1255, %v1004
      %1258 = vst.msk [vmem:[%s226 + $0x10] sm:$0xff] %vm1255, %v1009
      %1259 = vst.msk [vmem:[%s226 + $0x18] sm:$0xff] %vm1255, %v1012
      %1260 = vst.msk [vmem:[%s226 + $0x20] sm:$0xff] %vm1255, %v1017
      %1261 = vst.msk [vmem:[%s226 + $0x28] sm:$0xff] %vm1255, %v1020
      %1262 = vst.msk [vmem:[%s226 + $0x30] sm:$0xff] %vm1255, %v1025
      %1263 = vst.msk [vmem:[%s226 + $0x38] sm:$0xff] %vm1255, %v1028
      %1264 = vst.msk [vmem:[%s226 + $0x40] sm:$0xff] %vm1255, %v1033
      %1265 = vst.msk [vmem:[%s226 + $0x48] sm:$0xff] %vm1255, %v1036
      %1266 = vst.msk [vmem:[%s226 + $0x50] sm:$0xff] %vm1255, %v1041
      %1267 = vst.msk [vmem:[%s226 + $0x58] sm:$0xff] %vm1255, %v1044
      %1268 = vst.msk [vmem:[%s226 + $0x60] sm:$0xff] %vm1255, %v1049
      %1269 = vst.msk [vmem:[%s226 + $0x68] sm:$0xff] %vm1255, %v1052
      %1270 = vst.msk [vmem:[%s226 + $0x70] sm:$0xff] %vm1255, %v1057
      %1271 = vst.msk [vmem:[%s226 + $0x78] sm:$0xff] %vm1255, %v1060
      %1272 = vst.msk [vmem:[%s226 + $0x80] sm:$0xff] %vm1255, %v1065
      %1273 = vst.msk [vmem:[%s226 + $0x88] sm:$0xff] %vm1255, %v1068
      %1274 = vst.msk [vmem:[%s226 + $0x90] sm:$0xff] %vm1255, %v1073
      %1275 = vst.msk [vmem:[%s226 + $0x98] sm:$0xff] %vm1255, %v1076
      %1276 = vst.msk [vmem:[%s226 + $0xa0] sm:$0xff] %vm1255, %v1081
      %1277 = vst.msk [vmem:[%s226 + $0xa8] sm:$0xff] %vm1255, %v1084
      %1278 = vst.msk [vmem:[%s226 + $0xb0] sm:$0xff] %vm1255, %v1089
      %1279 = vst.msk [vmem:[%s226 + $0xb8] sm:$0xff] %vm1255, %v1092
      %1280 = vst.msk [vmem:[%s226 + $0xc0] sm:$0xff] %vm1255, %v1097
      %1281 = vst.msk [vmem:[%s226 + $0xc8] sm:$0xff] %vm1255, %v1100
      %1282 = vst.msk [vmem:[%s226 + $0xd0] sm:$0xff] %vm1255, %v1105
      %1283 = vst.msk [vmem:[%s226 + $0xd8] sm:$0xff] %vm1255, %v1108
      %1284 = vst.msk [vmem:[%s226 + $0xe0] sm:$0xff] %vm1255, %v1113
      %1285 = vst.msk [vmem:[%s226 + $0xe8] sm:$0xff] %vm1255, %v1116
      %1286 = vst.msk [vmem:[%s226 + $0xf0] sm:$0xff] %vm1255, %v1121
      %1287 = vst.msk [vmem:[%s226 + $0xf8] sm:$0xff] %vm1255, %v1124
      %1288 = vst.msk [vmem:[%s226 + $0x100] sm:$0xff] %vm1255, %v1129
      %1289 = vst.msk [vmem:[%s226 + $0x108] sm:$0xff] %vm1255, %v1132
      %1290 = vst.msk [vmem:[%s226 + $0x110] sm:$0xff] %vm1255, %v1137
      %1291 = vst.msk [vmem:[%s226 + $0x118] sm:$0xff] %vm1255, %v1140
      %1292 = vst.msk [vmem:[%s226 + $0x120] sm:$0xff] %vm1255, %v1145
      %1293 = vst.msk [vmem:[%s226 + $0x128] sm:$0xff] %vm1255, %v1148
      %1294 = vst.msk [vmem:[%s226 + $0x130] sm:$0xff] %vm1255, %v1153
      %1295 = vst.msk [vmem:[%s226 + $0x138] sm:$0xff] %vm1255, %v1156
      %1296 = vst.msk [vmem:[%s226 + $0x140] sm:$0xff] %vm1255, %v1161
      %1297 = vst.msk [vmem:[%s226 + $0x148] sm:$0xff] %vm1255, %v1164
      %1298 = vst.msk [vmem:[%s226 + $0x150] sm:$0xff] %vm1255, %v1169
      %1299 = vst.msk [vmem:[%s226 + $0x158] sm:$0xff] %vm1255, %v1172
      %1300 = vst.msk [vmem:[%s226 + $0x160] sm:$0xff] %vm1255, %v1177
      %1301 = vst.msk [vmem:[%s226 + $0x168] sm:$0xff] %vm1255, %v1180
      %1302 = vst.msk [vmem:[%s226 + $0x170] sm:$0xff] %vm1255, %v1185
      %1303 = vst.msk [vmem:[%s226 + $0x178] sm:$0xff] %vm1255, %v1188
      %1304 = vst.msk [vmem:[%s226 + $0x180] sm:$0xff] %vm1255, %v1193
      %1305 = vst.msk [vmem:[%s226 + $0x188] sm:$0xff] %vm1255, %v1196
      %1306 = vst.msk [vmem:[%s226 + $0x190] sm:$0xff] %vm1255, %v1201
      %1307 = vst.msk [vmem:[%s226 + $0x198] sm:$0xff] %vm1255, %v1204
      %1308 = vst.msk [vmem:[%s226 + $0x1a0] sm:$0xff] %vm1255, %v1209
      %1309 = vst.msk [vmem:[%s226 + $0x1a8] sm:$0xff] %vm1255, %v1212
      %1310 = vst.msk [vmem:[%s226 + $0x1b0] sm:$0xff] %vm1255, %v1217
      %1311 = vst.msk [vmem:[%s226 + $0x1b8] sm:$0xff] %vm1255, %v1220
      %1312 = vst.msk [vmem:[%s226 + $0x1c0] sm:$0xff] %vm1255, %v1225
      %1313 = vst.msk [vmem:[%s226 + $0x1c8] sm:$0xff] %vm1255, %v1228
      %1314 = vst.msk [vmem:[%s226 + $0x1d0] sm:$0xff] %vm1255, %v1233
      %1315 = vst.msk [vmem:[%s226 + $0x1d8] sm:$0xff] %vm1255, %v1236
      %1316 = vst.msk [vmem:[%s226 + $0x1e0] sm:$0xff] %vm1255, %v1241
      %1317 = vst.msk [vmem:[%s226 + $0x1e8] sm:$0xff] %vm1255, %v1244
      %1318 = vst.msk [vmem:[%s226 + $0x1f0] sm:$0xff] %vm1255, %v1249
      %1319 = vst.msk [vmem:[%s226 + $0x1f8] sm:$0xff] %vm1255, %v1252
      %s1320 = smul.u32 64, %s16
      %p1321 = scmp.lt.s32.totalorder %s1320, 127
      %s1322 = scalar_select %p1321, %s1320, 127
      %s1323 = smul.addr %s1322, 8
      %s1324 = scalar_lea.vmem %s5, %s1323
      // Predicated region
      $region41: #{tpu_custom_call.1} parent=39 // pred_check
        %p1325 = pneg %p144
      $region42: #{tpu_custom_call.1} parent=39 // pred_check_branch
        %1327 = sbr.rel (%p1325) target = $region44
      $region43: #{tpu_custom_call.1} parent=39 // pred_region
        %s1328 = smul.u32 64, %s16
      $region44: #{tpu_custom_call.1} parent=39 // pred_fallthru
        _
    $region40: #{tpu_custom_call.1} parent=5 // pred_fallthru
      _
    %p1329 = scmp.le.s32.totalorder 2, %s11
    // Predicated region
    $region45: #{tpu_custom_call.1} parent=5 // pred_check
      %p1330 = pneg %p1329
    $region46: #{tpu_custom_call.1} parent=5 // pred_check_branch
      %1332 = sbr.rel (%p1330) target = $region48
    $region47: #{tpu_custom_call.1} parent=5 // pred_region
      %s1333 = ssub.s32 %s11, 2
      // Predicated region
      $region49: #{tpu_custom_call.1} parent=47 // pred_check
        %p1334 = pneg %p150
      $region50: #{tpu_custom_call.1} parent=47 // pred_check_branch
        %1336 = sbr.rel (%p1334) target = $region52
      $region51: #{tpu_custom_call.1} parent=47 // pred_region
        %s1337 = smul.u32 64, %s17
        %p1338 = scmp.lt.s32.totalorder %s1337, 127
        %s1339 = scalar_select %p1338, %s1337, 127
        %s1340 = smul.addr %s1339, 8
        %s1341 = scalar_lea.vmem %s5, %s1340
      $region52: #{tpu_custom_call.1} parent=47 // pred_fallthru
        _
    $region48: #{tpu_custom_call.1} parent=5 // pred_fallthru
      _
  $region6: #{tpu_custom_call.1} parent=0 // loop_footer
    %s15 = sadd.s32 1, %s11
  $region7: #{tpu_custom_call.1} parent=0 // loop_footer_branch
    %10 = sbr.rel target = $region3
  $region8: #{tpu_custom_call.1} parent=0 // loop_exit
    _

</llo_original>
